<compile_context>
chip_gen: v6e
topology: v6e:2x2x1
jax: 0.10.0
libtpu: 0.0.40
codegen_flags: <defaults>
</compile_context>

<pallas_src>
import functools
import math

import jax
import jax.numpy as jnp
from jax import lax
from jax.experimental import pallas as pl
from jax.experimental.pallas import tpu as pltpu


# ------------------------------- helpers --------------------------------------

def _pick_block(n, candidates=(512, 256, 128, 64, 32, 16, 8)):
    for bm in candidates:
        if n % bm == 0:
            return bm
    return n


def _pick_row_block(batch):
    # Large row block => large reuse of the streamed column tensors
    # (flops/byte ~ bm_row), but keep >= 2 row blocks so the "parallel"
    # row axis can be split across TensorCores (v7x megacore).
    for bm in (1024, 512, 256, 128, 64, 32, 16, 8):
        if batch % bm == 0 and batch // bm >= 2:
            return bm
    return batch


def _pick_col_block(batch):
    for bm in (256, 128, 64, 32, 16, 8):
        if batch % bm == 0:
            return bm
    return batch


# A @ B.T expressed as dimension numbers (no materialized transpose).
_DOT_DN = (((1,), (1,)), ((), ()))

# Packed per-row accumulator slots (single (bm_row, 16) f32 VMEM scratch).
_S_DIAG = 0                          # positive (diagonal) logit
_S_LVT, _S_LTV = 1, 2                # sum(exp(s - 1/T)) plain v2t / t2v
_S_LHVT, _S_LHTV = 3, 4              # sum(exp(s - 1/T)) hard  v2t / t2v
_S_MVT, _S_MTV = 5, 6                # running max (accuracy flag only)
_S_MHVT, _S_MHTV = 7, 8
_N_SLOTS = 16


# ----------------- kernel 1: normalize + temperature fold (+ bf16) ------------

def _normalize_kernel(*refs, n, scale):
    in_refs, out_refs = refs[:n], refs[n:]
    for x_ref, o_ref in zip(in_refs, out_refs):
        x = x_ref[...].astype(jnp.float32)
        ssq = jnp.sum(x * x, axis=1, keepdims=True)
        # F.normalize(p=2, dim=1): x / max(||x||, 1e-12)  -> rsqrt (EUP slot)
        inv = lax.rsqrt(jnp.maximum(ssq, 1e-24))
        o_ref[...] = (x * (inv * scale)).astype(o_ref.dtype)


def _normalize_features(feats, temperature):
    """L2-normalize, fold 1/sqrt(T) into each side, cast to bf16 for MXU rate
    (f32 is kept for tiny batches where bf16 tiling would be degenerate)."""
    B, D = feats[0].shape
    bm = _pick_block(B)
    n = len(feats)
    out_dtype = jnp.bfloat16 if B >= 16 else jnp.float32
    scale = float(1.0 / math.sqrt(temperature))
    spec = pl.BlockSpec((bm, D), lambda i: (i, 0))
    return pl.pallas_call(
        functools.partial(_normalize_kernel, n=n, scale=scale),
        out_shape=tuple(jax.ShapeDtypeStruct((B, D), out_dtype) for _ in feats),
        grid_spec=pltpu.PrefetchScalarGridSpec(
            num_scalar_prefetch=0,
            grid=(B // bm,),
            in_specs=[spec] * n,
            out_specs=tuple([spec] * n),
        ),
        compiler_params=pltpu.CompilerParams(dimension_semantics=("parallel",)),
    )(*feats)


# ----------------- kernel 2: fused tiled contrastive (+ hard negatives) -------

def _fused_contrastive_kernel(*refs, has_hard, shift):
    if has_hard:
        v_row, t_row, t_col, v_col, ht_col, hv_col, out_ref, acc = refs
    else:
        v_row, t_row, t_col, v_col, out_ref, acc = refs

    j = pl.program_id(1)
    nj = pl.num_programs(1)

    v_i = v_row[...]   # (bm_row, D), normalized, 1/sqrt(T)-folded
    t_i = t_row[...]

    @pl.when(j == 0)
    def _init():
        bm = acc.shape[0]
        # Positive logit = diag(v @ t.T): row-wise dot of the two row tiles
        # already in vregs — no bm x bm iota/where needed.
        d = jnp.sum(v_i.astype(jnp.float32) * t_i.astype(jnp.float32),
                    axis=1, keepdims=True)
        acc[:, _S_DIAG:_S_DIAG + 1] = d
        acc[:, _S_LVT:_S_LHTV + 1] = jnp.zeros((bm, 4), jnp.float32)
        acc[:, _S_MVT:_S_MHTV + 1] = jnp.full((bm, 4), -jnp.inf, jnp.float32)

    def _accum(tile, l_slot, m_slot):
        # Logits are bounded by 1/T (both sides normalized with 1/sqrt(T)
        # folded in), so the constant shift keeps every exp argument <= 0:
        # no running-max rescale and no serial dependence across j steps.
        acc[:, l_slot:l_slot + 1] = (
            acc[:, l_slot:l_slot + 1]
            + jnp.sum(jnp.exp(tile - shift), axis=1, keepdims=True))
        acc[:, m_slot:m_slot + 1] = jnp.maximum(
            acc[:, m_slot:m_slot + 1], jnp.max(tile, axis=1, keepdims=True))

    # 1/T is already folded into the features, so these ARE the logits.
    s_vt = lax.dot_general(v_i, t_col[...], _DOT_DN,
                           preferred_element_type=jnp.float32)
    s_tv = lax.dot_general(t_i, v_col[...], _DOT_DN,
                           preferred_element_type=jnp.float32)
    _accum(s_vt, _S_LVT, _S_MVT)
    _accum(s_tv, _S_LTV, _S_MTV)

    if has_hard:
        h_vt = lax.dot_general(v_i, ht_col[...], _DOT_DN,
                               preferred_element_type=jnp.float32)
        h_tv = lax.dot_general(t_i, hv_col[...], _DOT_DN,
                               preferred_element_type=jnp.float32)
        _accum(h_vt, _S_LHVT, _S_MHVT)
        _accum(h_tv, _S_LHTV, _S_MHTV)

    @pl.when(j == nj - 1)
    def _finalize():
        floor = 1e-37   # guard against total underflow at extreme temperatures
        d = acc[:, _S_DIAG:_S_DIAG + 1]
        l_vt = acc[:, _S_LVT:_S_LVT + 1]
        l_tv = acc[:, _S_LTV:_S_LTV + 1]
        m_vt = acc[:, _S_MVT:_S_MVT + 1]
        m_tv = acc[:, _S_MTV:_S_MTV + 1]
        out_ref[:, 0:1] = shift + jnp.log(jnp.maximum(l_vt, floor)) - d
        out_ref[:, 1:2] = shift + jnp.log(jnp.maximum(l_tv, floor)) - d
        out_ref[:, 2:3] = (d >= m_vt).astype(jnp.float32)
        out_ref[:, 3:4] = (d >= m_tv).astype(jnp.float32)
        if has_hard:
            lh_vt = acc[:, _S_LHVT:_S_LHVT + 1]
            lh_tv = acc[:, _S_LHTV:_S_LHTV + 1]
            mh_vt = acc[:, _S_MHVT:_S_MHVT + 1]
            mh_tv = acc[:, _S_MHTV:_S_MHTV + 1]
            # Combined denominator = in-batch logits + hard-negative logits,
            # exactly as torch.cat([pos_similarity, hard_sim], dim=1).
            out_ref[:, 4:5] = shift + jnp.log(jnp.maximum(l_vt + lh_vt, floor)) - d
            out_ref[:, 5:6] = shift + jnp.log(jnp.maximum(l_tv + lh_tv, floor)) - d
            out_ref[:, 6:7] = (d >= jnp.maximum(m_vt, mh_vt)).astype(jnp.float32)
            out_ref[:, 7:8] = (d >= jnp.maximum(m_tv, mh_tv)).astype(jnp.float32)


def _fused_vmem_limit(bm_row, bm_col, D, n_col_streams, n_dirs, itemsize):
    """Real footprint of the fused kernel, doubled for compiler temps,
    clamped to [32 MiB, 48 MiB] — safe on v7x's 64 MiB VMEM."""
    lane = 128
    d_pad = max(D, lane)
    c_pad = max(bm_col, lane)
    need = (2 * 2 * bm_row * d_pad * itemsize               # row tiles, 2-buffered
            + n_col_streams * 2 * bm_col * d_pad * itemsize  # col tiles, 2-buffered
            + 2 * bm_row * lane * 4                          # output block
            + bm_row * lane * 4                              # packed scratch
            + n_dirs * bm_row * c_pad * 4)                   # f32 similarity tiles
    return int(min(max(2 * need, 32 << 20), 48 << 20))


def fused_contrastive_metrics(vision, text, temperature,
                              hard_vision=None, hard_text=None):
    """Returns mean metrics:
       [v2t_loss, t2v_loss, v2t_acc, t2v_acc,
        (hard_v2t_loss, hard_t2v_loss, hard_v2t_acc, hard_t2v_acc)]"""
    B, D = vision.shape
    bm_row = _pick_row_block(B)
    bm_col = _pick_col_block(B)
    has_hard = hard_vision is not None and hard_text is not None

    feats = [vision, text] + ([hard_vision, hard_text] if has_hard else [])
    normed = _normalize_features(feats, temperature)
    if has_hard:
        vn, tn, hvn, htn = normed
    else:
        vn, tn = normed

    row_spec = pl.BlockSpec((bm_row, D), lambda i, j: (i, 0))
    col_spec = pl.BlockSpec((bm_col, D), lambda i, j: (j, 0))
    n_out = 8 if has_hard else 4
    out_spec = pl.BlockSpec((bm_row, n_out), lambda i, j: (i, 0))

    if has_hard:
        in_specs = [row_spec, row_spec, col_spec, col_spec, col_spec, col_spec]
        inputs = (vn, tn, tn, vn, htn, hvn)
        n_dirs = 4
    else:
        in_specs = [row_spec, row_spec, col_spec, col_spec]
        inputs = (vn, tn, tn, vn)
        n_dirs = 2

    shift = float(1.0 / temperature)   # upper bound of every logit
    itemsize = jnp.dtype(vn.dtype).itemsize
    vmem_limit = _fused_vmem_limit(bm_row, bm_col, D, n_dirs, n_dirs, itemsize)

    per_row = pl.pallas_call(
        functools.partial(_fused_contrastive_kernel,
                          has_hard=has_hard, shift=shift),
        out_shape=jax.ShapeDtypeStruct((B, n_out), jnp.float32),
        grid_spec=pltpu.PrefetchScalarGridSpec(
            num_scalar_prefetch=0,
            grid=(B // bm_row, B // bm_col),     # reduction (col) axis last
            in_specs=in_specs,
            out_specs=out_spec,
            scratch_shapes=[pltpu.VMEM((bm_row, _N_SLOTS), jnp.float32)],
        ),
        compiler_params=pltpu.CompilerParams(
            dimension_semantics=("parallel", "arbitrary"),
            vmem_limit_bytes=vmem_limit),
    )(*inputs)

    return jnp.mean(per_row, axis=0)


# ----------------- kernel 3: classification CE + BCE matching (fused) ---------

def _classification_body(logits, labels):
    col = lax.broadcasted_iota(jnp.int32, logits.shape, 1)
    picked = jnp.sum(jnp.where(col == labels, logits, 0.0), axis=1, keepdims=True)
    m = jnp.max(logits, axis=1, keepdims=True)
    lse = jnp.log(jnp.sum(jnp.exp(logits - m), axis=1, keepdims=True)) + m
    loss = jnp.mean(lse - picked)
    acc = jnp.mean((picked >= m).astype(jnp.float32))
    return loss, acc


def _matching_body(x, y):
    # numerically stable BCEWithLogits
    loss = jnp.mean(jnp.maximum(x, 0.0) - x * y
                    + jnp.log(1.0 + jnp.exp(-jnp.abs(x))))
    pred = (x > 0.0).astype(jnp.float32)          # sigmoid(x) > 0.5  <=>  x > 0
    acc = jnp.mean((pred == y).astype(jnp.float32))
    return loss, acc


def _aux_both_kernel(cls_logits_ref, cls_labels_ref, mat_logits_ref,
                     mat_labels_ref, out_ref):
    cl, ca = _classification_body(cls_logits_ref[...].astype(jnp.float32),
                                  cls_labels_ref[...])
    ml, ma = _matching_body(mat_logits_ref[...].astype(jnp.float32),
                            mat_labels_ref[...].astype(jnp.float32))
    out_ref[0] = cl
    out_ref[1] = ca
    out_ref[2] = ml
    out_ref[3] = ma


def _cls_only_kernel(cls_logits_ref, cls_labels_ref, out_ref):
    cl, ca = _classification_body(cls_logits_ref[...].astype(jnp.float32),
                                  cls_labels_ref[...])
    out_ref[0] = cl
    out_ref[1] = ca


def _match_only_kernel(mat_logits_ref, mat_labels_ref, out_ref):
    ml, ma = _matching_body(mat_logits_ref[...].astype(jnp.float32),
                            mat_labels_ref[...].astype(jnp.float32))
    out_ref[0] = ml
    out_ref[1] = ma


def _run_aux(kernel, n_out, *args):
    # TODO(synk): for very large class counts (B*C f32 >> scoped VMEM) this
    # should be tiled over rows with the same online-lse pattern.
    return pl.pallas_call(
        kernel,
        out_shape=jax.ShapeDtypeStruct((n_out,), jnp.float32),
        in_specs=[pl.BlockSpec(memory_space=pltpu.MemorySpace.VMEM) for _ in args],
        out_specs=pl.BlockSpec(memory_space=pltpu.MemorySpace.SMEM),
    )(*args)


# ------------------------------- module wrapper --------------------------------

class MultiModalMixedContrastiveLoss:
    """JAX/Pallas re-implementation of the PyTorch module's forward pass."""

    def __init__(self, contrastive_weight=1.0, classification_weight=0.0,
                 multimodal_matching_weight=0.0, temperature=0.07,
                 use_hard_negatives=False, hard_negative_weight=0.5, dim=768):
        self.contrastive_weight = contrastive_weight
        self.classification_weight = classification_weight
        self.multimodal_matching_weight = multimodal_matching_weight
        self.temperature = temperature
        self.use_hard_negatives = use_hard_negatives
        self.hard_negative_weight = hard_negative_weight
        self.dim = dim
        print(f"MultiModalMixedContrastiveLoss initialized with dimension: {dim}")
        # ContrastiveLoss(add_projection=False) has no learnable parameters.

    def __call__(self, vision_features, text_features, match_ids=None,
                 class_logits=None, class_labels=None,
                 matching_logits=None, matching_labels=None,
                 hard_negatives=None):
        # TODO(synk): match_ids-based positive matching not implemented.
        results = {}
        total_loss = jnp.float32(0.0)

        if self.contrastive_weight > 0:
            hv = ht = None
            if self.use_hard_negatives and hard_negatives is not None:
                hv = hard_negatives.get("vision", None)
                ht = hard_negatives.get("text", None)
            has_hard = hv is not None and ht is not None

            m = fused_contrastive_metrics(vision_features, text_features,
                                          self.temperature, hv, ht)
            v2t_loss, t2v_loss, v2t_acc, t2v_acc = m[0], m[1], m[2], m[3]
            contrastive_loss = 0.5 * (v2t_loss + t2v_loss)
            contrastive_results = {
                "loss": contrastive_loss,
                "v2t_loss": v2t_loss,
                "t2v_loss": t2v_loss,
                "v2t_accuracy": v2t_acc,
                "t2v_accuracy": t2v_acc,
                "accuracy": 0.5 * (v2t_acc + t2v_acc),
            }

            if has_hard:
                h_v2t, h_t2v, h_v2t_acc, h_t2v_acc = m[4], m[5], m[6], m[7]
                hard_loss = 0.5 * (h_v2t + h_t2v)
                contrastive_loss = ((1.0 - self.hard_negative_weight) * contrastive_loss
                                    + self.hard_negative_weight * hard_loss)
                hard_results = {
                    "loss": hard_loss,
                    "v2t_loss": h_v2t,
                    "t2v_loss": h_t2v,
                    "v2t_accuracy": h_v2t_acc,
                    "t2v_accuracy": h_t2v_acc,
                    "accuracy": 0.5 * (h_v2t_acc + h_t2v_acc),
                }
                results.update({f"hard_{k}": v for k, v in hard_results.items()})

            weighted_contrastive_loss = self.contrastive_weight * contrastive_loss
            total_loss = total_loss + weighted_contrastive_loss
            results.update(contrastive_results)
            results["contrastive_loss"] = contrastive_loss
            results["weighted_contrastive_loss"] = weighted_contrastive_loss

        do_cls = (self.classification_weight > 0 and class_logits is not None
                  and class_labels is not None)
        do_match = (self.multimodal_matching_weight > 0 and matching_logits is not None
                    and matching_labels is not None)

        cls_loss = cls_acc = match_loss = match_acc = None
        if do_cls and do_match:
            labels2d = class_labels.reshape(-1, 1).astype(jnp.int32)
            mlabels = matching_labels.astype(jnp.float32).reshape(matching_logits.shape)
            aux = _run_aux(_aux_both_kernel, 4, class_logits, labels2d,
                           matching_logits, mlabels)
            cls_loss, cls_acc, match_loss, match_acc = aux[0], aux[1], aux[2], aux[3]
        elif do_cls:
            labels2d = class_labels.reshape(-1, 1).astype(jnp.int32)
            cm = _run_aux(_cls_only_kernel, 2, class_logits, labels2d)
            cls_loss, cls_acc = cm[0], cm[1]
        elif do_match:
            mlabels = matching_labels.astype(jnp.float32).reshape(matching_logits.shape)
            mm = _run_aux(_match_only_kernel, 2, matching_logits, mlabels)
            match_loss, match_acc = mm[0], mm[1]

        if do_cls:
            weighted_cls_loss = self.classification_weight * cls_loss
            total_loss = total_loss + weighted_cls_loss
            results["classification_loss"] = cls_loss
            results["weighted_classification_loss"] = weighted_cls_loss
            results["classification_accuracy"] = cls_acc

        if do_match:
            weighted_match_loss = self.multimodal_matching_weight * match_loss
            total_loss = total_loss + weighted_match_loss
            results["matching_loss"] = match_loss
            results["weighted_matching_loss"] = weighted_match_loss
            results["matching_accuracy"] = match_acc

        results["total_loss"] = total_loss
        return results


# ----------------------------------- main --------------------------------------

if __name__ == "__main__":
    B, D, C = 8, 32, 16   # small shapes: batch=8, feature dim=32, 16 classes
    key = jax.random.PRNGKey(0)
    keys = jax.random.split(key, 8)

    vision = jax.random.normal(keys[0], (B, D), jnp.float32)
    text = jax.random.normal(keys[1], (B, D), jnp.float32)
    hard_vision = jax.random.normal(keys[2], (B, D), jnp.float32)
    hard_text = jax.random.normal(keys[3], (B, D), jnp.float32)
    class_logits = jax.random.normal(keys[4], (B, C), jnp.float32)
    class_labels = jax.random.randint(keys[5], (B,), 0, C, jnp.int32)
    matching_logits = jax.random.normal(keys[6], (B, 1), jnp.float32)
    matching_labels = (jax.random.uniform(keys[7], (B, 1)) > 0.5).astype(jnp.float32)

    loss_mod = MultiModalMixedContrastiveLoss(
        contrastive_weight=1.0,
        classification_weight=0.5,
        multimodal_matching_weight=0.5,
        temperature=0.07,
        use_hard_negatives=True,
        hard_negative_weight=0.5,
        dim=D,
    )

    out = loss_mod(
        vision, text,
        class_logits=class_logits, class_labels=class_labels,
        matching_logits=matching_logits, matching_labels=matching_labels,
        hard_negatives={"vision": hard_vision, "text": hard_text},
    )

    jax.block_until_ready(out["total_loss"])
    assert bool(jnp.isfinite(out["total_loss"])), "non-finite total loss"
    print("KERNEL_OK")
</pallas_src>

<mosaic_0001>
module attributes {stable_mosaic.version = 11 : i64} {
  func.func @_normalize_kernel(%arg0: i32, %arg1: memref<8x32xf32, #tpu.memory_space<vmem>>, %arg2: memref<8x32xf32, #tpu.memory_space<vmem>>, %arg3: memref<8x32xf32, #tpu.memory_space<vmem>>, %arg4: memref<8x32xf32, #tpu.memory_space<vmem>>, %arg5: memref<8x32xf32, #tpu.memory_space<vmem>>, %arg6: memref<8x32xf32, #tpu.memory_space<vmem>>, %arg7: memref<8x32xf32, #tpu.memory_space<vmem>>, %arg8: memref<8x32xf32, #tpu.memory_space<vmem>>) attributes {dimension_semantics = [#tpu.dimension_semantics<parallel>], iteration_bounds = array<i64: 1>, scalar_prefetch = 0 : i64, scratch_operands = 0 : i64, tpu.core_type = #tpu.core_type<tc>, window_params = [{transform_indices = @transform_0, window_bounds = array<i64: 8, 32>}, {transform_indices = @transform_1, window_bounds = array<i64: 8, 32>}, {transform_indices = @transform_2, window_bounds = array<i64: 8, 32>}, {transform_indices = @transform_3, window_bounds = array<i64: 8, 32>}, {transform_indices = @transform_4, window_bounds = array<i64: 8, 32>}, {transform_indices = @transform_5, window_bounds = array<i64: 8, 32>}, {transform_indices = @transform_6, window_bounds = array<i64: 8, 32>}, {transform_indices = @transform_7, window_bounds = array<i64: 8, 32>}]} {
    %c0 = arith.constant 0 : index
    %c0_0 = arith.constant 0 : index
    %0 = vector.load %arg1[%c0, %c0_0] : memref<8x32xf32, #tpu.memory_space<vmem>>, vector<8x32xf32>
    %1 = arith.mulf %0, %0 : vector<8x32xf32>
    %cst = arith.constant dense<0.000000e+00> : vector<8xf32>
    %2 = vector.multi_reduction <add>, %1, %cst [1] : vector<8x32xf32> to vector<8xf32>
    %3 = vector.shape_cast %2 : vector<8xf32> to vector<8x1xf32>
    %cst_1 = arith.constant 1.000000e-24 : f32
    %4 = vector.broadcast %cst_1 : f32 to vector<8x1xf32>
    %5 = arith.maximumf %3, %4 : vector<8x1xf32>
    %6 = math.rsqrt %5 : vector<8x1xf32>
    %cst_2 = arith.constant 3.77964473 : f32
    %7 = vector.broadcast %cst_2 : f32 to vector<8x1xf32>
    %8 = arith.mulf %6, %7 : vector<8x1xf32>
    %9 = vector.broadcast %8 : vector<8x1xf32> to vector<8x32xf32>
    %10 = arith.mulf %0, %9 : vector<8x32xf32>
    %c0_3 = arith.constant 0 : index
    %c0_4 = arith.constant 0 : index
    %11 = vector.load %arg5[%c0_3, %c0_4] : memref<8x32xf32, #tpu.memory_space<vmem>>, vector<8x32xf32>
    tpu.vector_store %arg5[%c0_3, %c0_4], %10 {strides = array<i32>} : memref<8x32xf32, #tpu.memory_space<vmem>>, vector<8x32xf32>,
    %c0_5 = arith.constant 0 : index
    %c0_6 = arith.constant 0 : index
    %12 = vector.load %arg2[%c0_5, %c0_6] : memref<8x32xf32, #tpu.memory_space<vmem>>, vector<8x32xf32>
    %13 = arith.mulf %12, %12 : vector<8x32xf32>
    %cst_7 = arith.constant dense<0.000000e+00> : vector<8xf32>
    %14 = vector.multi_reduction <add>, %13, %cst_7 [1] : vector<8x32xf32> to vector<8xf32>
    %15 = vector.shape_cast %14 : vector<8xf32> to vector<8x1xf32>
    %cst_8 = arith.constant 1.000000e-24 : f32
    %16 = vector.broadcast %cst_8 : f32 to vector<8x1xf32>
    %17 = arith.maximumf %15, %16 : vector<8x1xf32>
    %18 = math.rsqrt %17 : vector<8x1xf32>
    %cst_9 = arith.constant 3.77964473 : f32
    %19 = vector.broadcast %cst_9 : f32 to vector<8x1xf32>
    %20 = arith.mulf %18, %19 : vector<8x1xf32>
    %21 = vector.broadcast %20 : vector<8x1xf32> to vector<8x32xf32>
    %22 = arith.mulf %12, %21 : vector<8x32xf32>
    %c0_10 = arith.constant 0 : index
    %c0_11 = arith.constant 0 : index
    %23 = vector.load %arg6[%c0_10, %c0_11] : memref<8x32xf32, #tpu.memory_space<vmem>>, vector<8x32xf32>
    tpu.vector_store %arg6[%c0_10, %c0_11], %22 {strides = array<i32>} : memref<8x32xf32, #tpu.memory_space<vmem>>, vector<8x32xf32>,
    %c0_12 = arith.constant 0 : index
    %c0_13 = arith.constant 0 : index
    %24 = vector.load %arg3[%c0_12, %c0_13] : memref<8x32xf32, #tpu.memory_space<vmem>>, vector<8x32xf32>
    %25 = arith.mulf %24, %24 : vector<8x32xf32>
    %cst_14 = arith.constant dense<0.000000e+00> : vector<8xf32>
    %26 = vector.multi_reduction <add>, %25, %cst_14 [1] : vector<8x32xf32> to vector<8xf32>
    %27 = vector.shape_cast %26 : vector<8xf32> to vector<8x1xf32>
    %cst_15 = arith.constant 1.000000e-24 : f32
    %28 = vector.broadcast %cst_15 : f32 to vector<8x1xf32>
    %29 = arith.maximumf %27, %28 : vector<8x1xf32>
    %30 = math.rsqrt %29 : vector<8x1xf32>
    %cst_16 = arith.constant 3.77964473 : f32
    %31 = vector.broadcast %cst_16 : f32 to vector<8x1xf32>
    %32 = arith.mulf %30, %31 : vector<8x1xf32>
    %33 = vector.broadcast %32 : vector<8x1xf32> to vector<8x32xf32>
    %34 = arith.mulf %24, %33 : vector<8x32xf32>
    %c0_17 = arith.constant 0 : index
    %c0_18 = arith.constant 0 : index
    %35 = vector.load %arg7[%c0_17, %c0_18] : memref<8x32xf32, #tpu.memory_space<vmem>>, vector<8x32xf32>
    tpu.vector_store %arg7[%c0_17, %c0_18], %34 {strides = array<i32>} : memref<8x32xf32, #tpu.memory_space<vmem>>, vector<8x32xf32>,
    %c0_19 = arith.constant 0 : index
    %c0_20 = arith.constant 0 : index
    %36 = vector.load %arg4[%c0_19, %c0_20] : memref<8x32xf32, #tpu.memory_space<vmem>>, vector<8x32xf32>
    %37 = arith.mulf %36, %36 : vector<8x32xf32>
    %cst_21 = arith.constant dense<0.000000e+00> : vector<8xf32>
    %38 = vector.multi_reduction <add>, %37, %cst_21 [1] : vector<8x32xf32> to vector<8xf32>
    %39 = vector.shape_cast %38 : vector<8xf32> to vector<8x1xf32>
    %cst_22 = arith.constant 1.000000e-24 : f32
    %40 = vector.broadcast %cst_22 : f32 to vector<8x1xf32>
    %41 = arith.maximumf %39, %40 : vector<8x1xf32>
    %42 = math.rsqrt %41 : vector<8x1xf32>
    %cst_23 = arith.constant 3.77964473 : f32
    %43 = vector.broadcast %cst_23 : f32 to vector<8x1xf32>
    %44 = arith.mulf %42, %43 : vector<8x1xf32>
    %45 = vector.broadcast %44 : vector<8x1xf32> to vector<8x32xf32>
    %46 = arith.mulf %36, %45 : vector<8x32xf32>
    %c0_24 = arith.constant 0 : index
    %c0_25 = arith.constant 0 : index
    %47 = vector.load %arg8[%c0_24, %c0_25] : memref<8x32xf32, #tpu.memory_space<vmem>>, vector<8x32xf32>
    tpu.vector_store %arg8[%c0_24, %c0_25], %46 {strides = array<i32>} : memref<8x32xf32, #tpu.memory_space<vmem>>, vector<8x32xf32>,
    return
  }
  func.func @transform_0(%arg0: i32) -> (i32, i32) {
    %c0_i32 = arith.constant 0 : i32
    %c0_i32_0 = arith.constant 0 : i32
    return %arg0, %c0_i32 : i32, i32
  }
  func.func @transform_1(%arg0: i32) -> (i32, i32) {
    %c0_i32 = arith.constant 0 : i32
    %c0_i32_0 = arith.constant 0 : i32
    return %arg0, %c0_i32 : i32, i32
  }
  func.func @transform_2(%arg0: i32) -> (i32, i32) {
    %c0_i32 = arith.constant 0 : i32
    %c0_i32_0 = arith.constant 0 : i32
    return %arg0, %c0_i32 : i32, i32
  }
  func.func @transform_3(%arg0: i32) -> (i32, i32) {
    %c0_i32 = arith.constant 0 : i32
    %c0_i32_0 = arith.constant 0 : i32
    return %arg0, %c0_i32 : i32, i32
  }
  func.func @transform_4(%arg0: i32) -> (i32, i32) {
    %c0_i32 = arith.constant 0 : i32
    %c0_i32_0 = arith.constant 0 : i32
    return %arg0, %c0_i32 : i32, i32
  }
  func.func @transform_5(%arg0: i32) -> (i32, i32) {
    %c0_i32 = arith.constant 0 : i32
    %c0_i32_0 = arith.constant 0 : i32
    return %arg0, %c0_i32 : i32, i32
  }
  func.func @transform_6(%arg0: i32) -> (i32, i32) {
    %c0_i32 = arith.constant 0 : i32
    %c0_i32_0 = arith.constant 0 : i32
    return %arg0, %c0_i32 : i32, i32
  }
  func.func @transform_7(%arg0: i32) -> (i32, i32) {
    %c0_i32 = arith.constant 0 : i32
    %c0_i32_0 = arith.constant 0 : i32
    return %arg0, %c0_i32 : i32, i32
  }
}

</mosaic_0001>

<llo_original>
// kernel: tpu_custom_call.1
$region0: #{tpu_custom_call.1}
  #allocation0 [shape = 'u32[]', space=smem, size = 0x4, offset = 0x4, fixed_abs, tag = 'smem constant byte address 0x4 - core index']
  #allocation1 [shape = 'u32[144,128]{1,0:T(1,128)}', space=vmem, size = 0x12000, scoped, tag = 'internal scratch']
  %s0 = inlined_call_operand.hbm [shape: f32[8,32], index: 0, kind: input, shape index: {}]
  %s1 = inlined_call_operand.hbm [shape: f32[8,32], index: 1, kind: input, shape index: {}]
  %s2 = inlined_call_operand.hbm [shape: f32[8,32], index: 2, kind: input, shape index: {}]
  %s3 = inlined_call_operand.hbm [shape: f32[8,32], index: 3, kind: input, shape index: {}]
  %s4 = inlined_call_operand.hbm [shape: f32[8,32], index: 4, kind: output, shape index: {0}]
  %s5 = inlined_call_operand.hbm [shape: f32[8,32], index: 5, kind: output, shape index: {1}]
  %s6 = inlined_call_operand.hbm [shape: f32[8,32], index: 6, kind: output, shape index: {2}]
  %s7 = inlined_call_operand.hbm [shape: f32[8,32], index: 7, kind: output, shape index: {3}]
  %8 = xla_tuple %s4, %s5, %s6, %s7
  %s9 = sld [smem:[#allocation0]]
  $region66: #{tpu_custom_call.1} parent=0
    _
  %s11 = ssub.s32 1, %s9
  %s12 = scalar_select 0, %s11, %s9
  $region1: #{tpu_custom_call.1} parent=0
    #allocation2 [shape = 'u8[4096]{0}', space=vmem, size = 0x1000, scoped, tag = 'input window, operand 0, single buffered']
    #allocation3 [shape = 's32[1]{0}', space=sflag, size = 0x4, scoped, tag = 'scoped memory for tpu_custom_call.1']
    #allocation4 [shape = 's32[1]{0}', space=sflag, size = 0x4, scoped, tag = 'scoped memory for tpu_custom_call.1']
    #allocation5 [shape = 'u8[4096]{0}', space=vmem, size = 0x1000, scoped, tag = 'input window, operand 1, single buffered']
    #allocation6 [shape = 's32[1]{0}', space=sflag, size = 0x4, scoped, tag = 'scoped memory for tpu_custom_call.1']
    #allocation7 [shape = 'u8[4096]{0}', space=vmem, size = 0x1000, scoped, tag = 'input window, operand 2, single buffered']
    #allocation8 [shape = 'u8[4096]{0}', space=vmem, size = 0x1000, scoped, tag = 'input window, operand 3, single buffered']
    #allocation9 [shape = 's32[1]{0}', space=sflag, size = 0x4, scoped, tag = 'scoped memory for tpu_custom_call.1']
    #allocation10 [shape = 'u8[4096]{0}', space=vmem, size = 0x1000, scoped, tag = 'output window, operand 0, single buffered']
    #allocation11 [shape = 'u8[4096]{0}', space=vmem, size = 0x1000, scoped, tag = 'output window, operand 1, single buffered']
    #allocation12 [shape = 's32[1]{0}', space=sflag, size = 0x4, scoped, tag = 'scoped memory for tpu_custom_call.1']
    #allocation13 [shape = 'u8[4096]{0}', space=vmem, size = 0x1000, scoped, tag = 'output window, operand 2, single buffered']
    #allocation14 [shape = 'u8[4096]{0}', space=vmem, size = 0x1000, scoped, tag = 'output window, operand 3, single buffered']
    #allocation15 [shape = 's32[1]{0}', space=sflag, size = 0x4, scoped, tag = 'scoped memory for tpu_custom_call.1']
    %13 = vsyncpa [#allocation3], 0
    %14 = vsyncpa [#allocation6], 0
    %15 = vsyncpa [#allocation9], 0
    %16 = vsyncpa [#allocation4], 0
    %17 = vsyncpa [#allocation12], 0
    %18 = vsyncpa [#allocation15], 0
    // Predicated region
    $region2: #{tpu_custom_call.1} parent=1 // pred_check
      _
    $region3: #{tpu_custom_call.1} parent=1 // pred_check_branch
      %20 = sbr.rel (0) target = $region5
    $region4: #{tpu_custom_call.1} parent=1 // pred_region
      %s22 = ssub.s32 128, 128
      %23 = vsyncadd [#allocation3], %s22
      %s25 = sshll.u32 [#allocation2], 4
      %s26 = int_to_ptr.vmem [resolvable:$true] %s25
      %28 = dma.hbm_to_vmem [thread:$0]  %s0, 128, %s26, [#allocation3]
    $region5: #{tpu_custom_call.1} parent=1 // pred_fallthru
      _
    // Predicated region
    $region6: #{tpu_custom_call.1} parent=1 // pred_check
      _
    $region7: #{tpu_custom_call.1} parent=1 // pred_check_branch
      %30 = sbr.rel (0) target = $region9
    $region8: #{tpu_custom_call.1} parent=1 // pred_region
      %s32 = ssub.s32 128, 128
      %33 = vsyncadd [#allocation6], %s32
      %s35 = sshll.u32 [#allocation5], 4
      %s36 = int_to_ptr.vmem [resolvable:$true] %s35
      %38 = dma.hbm_to_vmem [thread:$0]  %s1, 128, %s36, [#allocation6]
    $region9: #{tpu_custom_call.1} parent=1 // pred_fallthru
      _
    // Predicated region
    $region10: #{tpu_custom_call.1} parent=1 // pred_check
      _
    $region11: #{tpu_custom_call.1} parent=1 // pred_check_branch
      %40 = sbr.rel (0) target = $region13
    $region12: #{tpu_custom_call.1} parent=1 // pred_region
      %s42 = ssub.s32 128, 128
      %43 = vsyncadd [#allocation6], %s42
      %s45 = sshll.u32 [#allocation7], 4
      %s46 = int_to_ptr.vmem [resolvable:$true] %s45
      %48 = dma.hbm_to_vmem [thread:$0]  %s2, 128, %s46, [#allocation6]
    $region13: #{tpu_custom_call.1} parent=1 // pred_fallthru
      _
    // Predicated region
    $region14: #{tpu_custom_call.1} parent=1 // pred_check
      _
    $region15: #{tpu_custom_call.1} parent=1 // pred_check_branch
      %50 = sbr.rel (0) target = $region17
    $region16: #{tpu_custom_call.1} parent=1 // pred_region
      %s52 = ssub.s32 128, 128
      %53 = vsyncadd [#allocation9], %s52
      %s55 = sshll.u32 [#allocation8], 4
      %s56 = int_to_ptr.vmem [resolvable:$true] %s55
      %58 = dma.hbm_to_vmem [thread:$0]  %s3, 128, %s56, [#allocation9]
    $region17: #{tpu_custom_call.1} parent=1 // pred_fallthru
      _
    // Predicated region
    $region18: #{tpu_custom_call.1} parent=1 // pred_check
      _
    $region19: #{tpu_custom_call.1} parent=1 // pred_check_branch
      %60 = sbr.rel (0) target = $region21
    $region20: #{tpu_custom_call.1} parent=1 // pred_region
      %61 = dma.done [#allocation3], 128
    $region21: #{tpu_custom_call.1} parent=1 // pred_fallthru
      _
    // Predicated region
    $region22: #{tpu_custom_call.1} parent=1 // pred_check
      _
    $region23: #{tpu_custom_call.1} parent=1 // pred_check_branch
      %63 = sbr.rel (0) target = $region25
    $region24: #{tpu_custom_call.1} parent=1 // pred_region
      %64 = dma.done [#allocation6], 128
    $region25: #{tpu_custom_call.1} parent=1 // pred_fallthru
      _
    // Predicated region
    $region26: #{tpu_custom_call.1} parent=1 // pred_check
      _
    $region27: #{tpu_custom_call.1} parent=1 // pred_check_branch
      %66 = sbr.rel (0) target = $region29
    $region28: #{tpu_custom_call.1} parent=1 // pred_region
      %67 = dma.done [#allocation6], 128
    $region29: #{tpu_custom_call.1} parent=1 // pred_fallthru
      _
    // Predicated region
    $region30: #{tpu_custom_call.1} parent=1 // pred_check
      _
    $region31: #{tpu_custom_call.1} parent=1 // pred_check_branch
      %69 = sbr.rel (0) target = $region33
    $region32: #{tpu_custom_call.1} parent=1 // pred_region
      %70 = dma.done [#allocation9], 128
    $region33: #{tpu_custom_call.1} parent=1 // pred_fallthru
      _
    %v71 = vld [vmem:[#allocation2] sm:$0xff]
    %v72 = vmul.f32 %v71, %v71
    %vm73 = vcmask 261120
    %v74 = vsel %vm73, %v72, 0.0
    %75 = vadd.xlane.f32.xlu0 %v74
    %v76 = vpop.xlane.xlu0 %75
    %v77 = vmax.f32 %v76, 1e-24
    %v78 = vrsqrt.pop %v77
    %v79 = vmul.f32 %v78, 3.7796447
    %v80 = vmul.f32 %v71, %v79
    %81 = vst.msk [vmem:[#allocation10] sm:$0xff] %vm73, %v80
    %v82 = vld [vmem:[#allocation5] sm:$0xff]
    %v83 = vmul.f32 %v82, %v82
    %v84 = vsel %vm73, %v83, 0.0
    %85 = vadd.xlane.f32.xlu0 %v84
    %v86 = vpop.xlane.xlu0 %85
    %v87 = vmax.f32 %v86, 1e-24
    %v88 = vrsqrt.pop %v87
    %v89 = vmul.f32 %v88, 3.7796447
    %v90 = vmul.f32 %v82, %v89
    %91 = vst.msk [vmem:[#allocation11] sm:$0xff] %vm73, %v90
    %v92 = vld [vmem:[#allocation7] sm:$0xff]
    %v93 = vmul.f32 %v92, %v92
    %v94 = vsel %vm73, %v93, 0.0
    %95 = vadd.xlane.f32.xlu0 %v94
    %v96 = vpop.xlane.xlu0 %95
    %v97 = vmax.f32 %v96, 1e-24
    %v98 = vrsqrt.pop %v97
    %v99 = vmul.f32 %v98, 3.7796447
    %v100 = vmul.f32 %v92, %v99
    %101 = vst.msk [vmem:[#allocation13] sm:$0xff] %vm73, %v100
    %v102 = vld [vmem:[#allocation8] sm:$0xff]
    %v103 = vmul.f32 %v102, %v102
    %v104 = vsel %vm73, %v103, 0.0
    %105 = vadd.xlane.f32.xlu0 %v104
    %v106 = vpop.xlane.xlu0 %105
    %v107 = vmax.f32 %v106, 1e-24
    %v108 = vrsqrt.pop %v107
    %v109 = vmul.f32 %v108, 3.7796447
    %v110 = vmul.f32 %v102, %v109
    %111 = vst.msk [vmem:[#allocation14] sm:$0xff] %vm73, %v110
    // Predicated region
    $region34: #{tpu_custom_call.1} parent=1 // pred_check
      _
    $region35: #{tpu_custom_call.1} parent=1 // pred_check_branch
      %113 = sbr.rel (0) target = $region37
    $region36: #{tpu_custom_call.1} parent=1 // pred_region
      %s115 = ssub.s32 128, 128
      %116 = vsyncadd [#allocation4], %s115
      %s118 = sshll.u32 [#allocation10], 4
      %s119 = int_to_ptr.vmem [resolvable:$true] %s118
      %121 = dma.vmem_to_hbm [thread:$0]  %s119, 128, %s4, [#allocation4]
    $region37: #{tpu_custom_call.1} parent=1 // pred_fallthru
      _
    // Predicated region
    $region38: #{tpu_custom_call.1} parent=1 // pred_check
      _
    $region39: #{tpu_custom_call.1} parent=1 // pred_check_branch
      %123 = sbr.rel (0) target = $region41
    $region40: #{tpu_custom_call.1} parent=1 // pred_region
      %s125 = ssub.s32 128, 128
      %126 = vsyncadd [#allocation12], %s125
      %s128 = sshll.u32 [#allocation11], 4
      %s129 = int_to_ptr.vmem [resolvable:$true] %s128
      %131 = dma.vmem_to_hbm [thread:$0]  %s129, 128, %s5, [#allocation12]
    $region41: #{tpu_custom_call.1} parent=1 // pred_fallthru
      _
    // Predicated region
    $region42: #{tpu_custom_call.1} parent=1 // pred_check
      _
    $region43: #{tpu_custom_call.1} parent=1 // pred_check_branch
      %133 = sbr.rel (0) target = $region45
    $region44: #{tpu_custom_call.1} parent=1 // pred_region
      %s135 = ssub.s32 128, 128
      %136 = vsyncadd [#allocation12], %s135
      %s138 = sshll.u32 [#allocation13], 4
      %s139 = int_to_ptr.vmem [resolvable:$true] %s138
      %141 = dma.vmem_to_hbm [thread:$0]  %s139, 128, %s6, [#allocation12]
    $region45: #{tpu_custom_call.1} parent=1 // pred_fallthru
      _
    // Predicated region
    $region46: #{tpu_custom_call.1} parent=1 // pred_check
      _
    $region47: #{tpu_custom_call.1} parent=1 // pred_check_branch
      %143 = sbr.rel (0) target = $region49
    $region48: #{tpu_custom_call.1} parent=1 // pred_region
      %s145 = ssub.s32 128, 128
      %146 = vsyncadd [#allocation15], %s145
      %s148 = sshll.u32 [#allocation14], 4
      %s149 = int_to_ptr.vmem [resolvable:$true] %s148
      %151 = dma.vmem_to_hbm [thread:$0]  %s149, 128, %s7, [#allocation15]
    $region49: #{tpu_custom_call.1} parent=1 // pred_fallthru
      _
    // Predicated region
    $region50: #{tpu_custom_call.1} parent=1 // pred_check
      _
    $region51: #{tpu_custom_call.1} parent=1 // pred_check_branch
      %153 = sbr.rel (0) target = $region53
    $region52: #{tpu_custom_call.1} parent=1 // pred_region
      %154 = dma.done [#allocation4], 128
    $region53: #{tpu_custom_call.1} parent=1 // pred_fallthru
      _
    // Predicated region
    $region54: #{tpu_custom_call.1} parent=1 // pred_check
      _
    $region55: #{tpu_custom_call.1} parent=1 // pred_check_branch
      %156 = sbr.rel (0) target = $region57
    $region56: #{tpu_custom_call.1} parent=1 // pred_region
      %157 = dma.done [#allocation12], 128
    $region57: #{tpu_custom_call.1} parent=1 // pred_fallthru
      _
    // Predicated region
    $region58: #{tpu_custom_call.1} parent=1 // pred_check
      _
    $region59: #{tpu_custom_call.1} parent=1 // pred_check_branch
      %159 = sbr.rel (0) target = $region61
    $region60: #{tpu_custom_call.1} parent=1 // pred_region
      %160 = dma.done [#allocation12], 128
    $region61: #{tpu_custom_call.1} parent=1 // pred_fallthru
      _
    // Predicated region
    $region62: #{tpu_custom_call.1} parent=1 // pred_check
      _
    $region63: #{tpu_custom_call.1} parent=1 // pred_check_branch
      %162 = sbr.rel (0) target = $region65
    $region64: #{tpu_custom_call.1} parent=1 // pred_region
      %163 = dma.done [#allocation15], 128
    $region65: #{tpu_custom_call.1} parent=1 // pred_fallthru
      _
    %164 = vsyncpa [#allocation3], 1
    %165 = vsyncpa [#allocation6], 1
    %166 = vsyncpa [#allocation9], 1
    %167 = vsyncpa [#allocation4], 1
    %168 = vsyncpa [#allocation12], 1
    %169 = vsyncpa [#allocation15], 1

</llo_original>
